<compile_context>
chip_gen: v7x
topology: tpu7x:2x2x1
jax: 0.10.0
libtpu: 0.0.40
codegen_flags: <defaults>
</compile_context>

<pallas_src>
import jax
import jax.numpy as jnp
from jax import lax
from jax.experimental import pallas as pl
from jax.experimental.pallas import tpu as pltpu

LANES = 128
CHUNK_TARGET_ROWS = 256          # inner compute granule (rows); 256*128*4B = 128 KiB f32
TARGET_BLOCK_BYTES = 8 << 20     # ~8 MiB DMA blocks (safe for v5e..v7x, double buffered)


def _softplus(x):
    # Numerically stable softplus: max(x,0) + log1p(exp(-|x|))
    return jnp.maximum(x, 0.0) + jnp.log1p(jnp.exp(-jnp.abs(x)))


def _make_elementwise(gan_type, target_is_real, is_disc, real_label_val, fake_label_val):
    """Per-element loss f(x) (f32 -> f32) such that loss = mean(f(x))."""
    target_val = real_label_val if target_is_real else fake_label_val
    if gan_type == 'vanilla':
        # BCEWithLogitsLoss(x, t) = max(x,0) - x*t + log1p(exp(-|x|)).
        if target_val == 1.0:
            return lambda x: _softplus(-x)       # exact simplification for t = 1
        if target_val == 0.0:
            return _softplus                     # exact simplification for t = 0
        t = float(target_val)
        return lambda x: jnp.maximum(x, 0.0) - x * t + jnp.log1p(jnp.exp(-jnp.abs(x)))
    if gan_type == 'lsgan':
        t = float(target_val)
        return lambda x: (x - t) * (x - t)
    if gan_type == 'wgan':
        return (lambda x: -x) if target_is_real else (lambda x: x)
    if gan_type == 'wgan_softplus':
        return (lambda x: _softplus(-x)) if target_is_real else _softplus
    if gan_type == 'hinge':
        if is_disc:
            if target_is_real:
                return lambda x: jnp.maximum(1.0 - x, 0.0)
            return lambda x: jnp.maximum(1.0 + x, 0.0)
        return lambda x: -x                      # generator: -mean(x)
    raise NotImplementedError(f'GAN type {gan_type} is not implemented.')


def _make_kernel(elementwise, chunk_rows, acc_rows, chunks_per_tile, total_chunks,
                 ragged_grid):
    """Kernel producing one (acc_rows, 128) f32 partial-sum of f(x)."""
    groups = chunk_rows // acc_rows

    def kernel(x_ref, o_ref, acc_ref):
        i = pl.program_id(0)

        @pl.when(i == 0)
        def _():
            acc_ref[...] = jnp.zeros_like(acc_ref)

        def chunk_body(c, carry):
            r0 = pl.multiple_of(c * chunk_rows, chunk_rows)
            xc = x_ref[pl.ds(r0, chunk_rows), :].astype(jnp.float32)
            f = elementwise(xc)
            # Fold the chunk onto a few independent accumulator vregs (pure VPU).
            acc_ref[...] += f.reshape(groups, acc_rows, LANES).sum(axis=0)
            return carry

        if ragged_grid:
            # Last block only contains (total_chunks - i*chunks_per_tile) valid
            # chunks; skip the rest entirely (no masking, no wasted compute).
            n_valid = jnp.minimum(chunks_per_tile, total_chunks - i * chunks_per_tile)
            lax.fori_loop(0, n_valid, chunk_body, 0)
        else:
            lax.fori_loop(0, chunks_per_tile, chunk_body, 0)

        @pl.when(i == pl.num_programs(0) - 1)
        def _():
            o_ref[...] = acc_ref[...]

    return kernel


def gan_loss_pallas(x, gan_type, target_is_real, is_disc=False,
                    real_label_val=1.0, fake_label_val=0.0, loss_weight=1.0):
    """Pallas implementation of basicsr GANLoss.forward."""
    total_n = int(x.size)
    elementwise = _make_elementwise(gan_type, bool(target_is_real), bool(is_disc),
                                    float(real_label_val), float(fake_label_val))

    flat = jnp.reshape(x, (-1,))                 # free bitcast for contiguous input
    itemsize = jnp.dtype(x.dtype).itemsize
    sub_mult = max(8, 32 // itemsize)            # min sublane multiple for non-full blocks
    rows = total_n // LANES

    chunk_rows = min(CHUNK_TARGET_ROWS, (rows // sub_mult) * sub_mult)
    kernel_rows = (rows // chunk_rows) * chunk_rows if chunk_rows else 0

    if kernel_rows == 0:
        # Tiny input (< one chunk): nothing worth streaming through a kernel.
        loss = jnp.sum(elementwise(flat.astype(jnp.float32))) / jnp.float32(total_n)
        return loss if is_disc else loss * jnp.float32(loss_weight)

    # Lane-dense 2-D view of the kernel-covered region.  Free when total_n is a
    # multiple of 128 (full-array reshape == bitcast).
    # TODO(synk): when total_n % 128 != 0 the prefix slice below still
    # materialises one HBM copy; a zero-copy path would require consuming the
    # original N-D layout inside the kernel.
    if rows * LANES == total_n:
        x2 = flat.reshape(rows, LANES)
    else:
        x2 = flat[: rows * LANES].reshape(rows, LANES)

    target_rows = max(chunk_rows,
                      (TARGET_BLOCK_BYTES // (LANES * itemsize) // chunk_rows) * chunk_rows)
    tile_rows = min(kernel_rows, target_rows)    # multiple of chunk_rows (>= sub_mult)
    nblocks = pl.cdiv(kernel_rows, tile_rows)
    chunks_per_tile = tile_rows // chunk_rows
    total_chunks = kernel_rows // chunk_rows
    ragged_grid = (kernel_rows % tile_rows) != 0

    acc_rows = next(r for r in (32, 16, 8) if chunk_rows % r == 0)

    kernel = _make_kernel(elementwise, chunk_rows, acc_rows, chunks_per_tile,
                          total_chunks, ragged_grid)

    block_bytes = tile_rows * LANES * itemsize
    vmem_limit = int(2 * block_bytes + (8 << 20))   # 2x block (double buffer) + headroom
    kernel_elems = kernel_rows * LANES
    transc_per_elem = 2 if gan_type in ('vanilla', 'wgan_softplus') else 0

    partials = pl.pallas_call(
        kernel,
        out_shape=jax.ShapeDtypeStruct((acc_rows, LANES), jnp.float32),
        grid_spec=pltpu.PrefetchScalarGridSpec(
            num_scalar_prefetch=0,
            grid=(nblocks,),
            in_specs=[pl.BlockSpec((tile_rows, LANES), lambda i: (i, 0))],
            out_specs=pl.BlockSpec((acc_rows, LANES), lambda i: (0, 0)),
            scratch_shapes=[pltpu.VMEM((acc_rows, LANES), jnp.float32)],
        ),
        compiler_params=pltpu.CompilerParams(
            dimension_semantics=("arbitrary",),
            vmem_limit_bytes=vmem_limit),
        cost_estimate=pl.CostEstimate(
            flops=4 * kernel_elems,
            transcendentals=transc_per_elem * kernel_elems,
            bytes_accessed=kernel_elems * itemsize + acc_rows * LANES * 4),
    )(x2)
    # TODO(synk): on v7x (2 TensorCores) a CORE_PARALLEL leading grid axis could
    # roughly halve runtime; omitted to keep codegen identical on 1-TC chips.

    total_sum = jnp.sum(partials)

    # Remainder not covered by the kernel: < chunk_rows rows plus < 128 lane
    # tail, i.e. at most a few tens of KiB -- summed with plain jnp.
    tail_elems = total_n - kernel_rows * LANES
    if tail_elems:
        tail = flat[kernel_rows * LANES:]
        total_sum = total_sum + jnp.sum(elementwise(tail.astype(jnp.float32)))

    loss = total_sum / jnp.float32(total_n)
    # loss_weight applies only for generators (is_disc == False), as in PyTorch.
    return loss if is_disc else loss * jnp.float32(loss_weight)


def gan_loss_ref(x, gan_type, target_is_real, is_disc=False,
                 real_label_val=1.0, fake_label_val=0.0, loss_weight=1.0):
    """Pure-jnp reference mirroring the PyTorch module semantics."""
    x = jnp.asarray(x, jnp.float32)
    if gan_type == 'hinge':
        if is_disc:
            z = -x if target_is_real else x
            loss = jnp.mean(jax.nn.relu(1.0 + z))
        else:
            loss = -jnp.mean(x)
    elif gan_type == 'wgan':
        loss = -jnp.mean(x) if target_is_real else jnp.mean(x)
    elif gan_type == 'wgan_softplus':
        loss = (jnp.mean(jax.nn.softplus(-x)) if target_is_real
                else jnp.mean(jax.nn.softplus(x)))
    elif gan_type == 'vanilla':
        t = real_label_val if target_is_real else fake_label_val
        loss = jnp.mean(jnp.maximum(x, 0.0) - x * t + jnp.log1p(jnp.exp(-jnp.abs(x))))
    elif gan_type == 'lsgan':
        t = real_label_val if target_is_real else fake_label_val
        loss = jnp.mean((x - t) ** 2)
    else:
        raise NotImplementedError(gan_type)
    return loss if is_disc else loss * loss_weight


if __name__ == "__main__":
    key = jax.random.PRNGKey(0)
    # Discriminator-style prediction map, NCHW: (B=2, C=4, H=16, W=16)
    x_small = jax.random.normal(key, (2, 4, 16, 16), dtype=jnp.float32)

    gan_types = ['vanilla', 'lsgan', 'wgan', 'wgan_softplus', 'hinge']
    loss_weight = 0.5
    ok = True

    for gt in gan_types:
        for target_is_real in (True, False):
            for is_disc in (True, False):
                got = gan_loss_pallas(x_small, gt, target_is_real, is_disc,
                                      real_label_val=1.0, fake_label_val=0.0,
                                      loss_weight=loss_weight)
                got = jax.block_until_ready(got)
                want = gan_loss_ref(x_small, gt, target_is_real, is_disc,
                                    real_label_val=1.0, fake_label_val=0.0,
                                    loss_weight=loss_weight)
                if not jnp.allclose(got, want, atol=1e-5, rtol=1e-5):
                    ok = False
                    print(f"MISMATCH gt={gt} real={target_is_real} disc={is_disc} "
                          f"got={float(got)} want={float(want)}")

    # Larger / irregular maps: exercise the jnp row-remainder, the bf16 path,
    # the multi-block ragged grid (dynamic chunk count), and the lane-ragged
    # (% 128 != 0) prefix path.
    k1, k2, k3, k4 = jax.random.split(key, 4)
    bigger_inputs = [
        jax.random.normal(k1, (2, 8, 200, 180), dtype=jnp.float32),   # row remainder
        jax.random.normal(k2, (2, 6, 512, 256), dtype=jnp.bfloat16),  # bf16
        jax.random.normal(k3, (2, 5, 2000, 128), dtype=jnp.float32),  # ragged multi-block grid
        jax.random.normal(k4, (2, 4, 17, 19), dtype=jnp.float32),     # lane-ragged (%128 != 0)
    ]
    for xb in bigger_inputs:
        for gt, real, disc in (('vanilla', True, True), ('hinge', False, False)):
            got = jax.block_until_ready(
                gan_loss_pallas(xb, gt, real, disc, loss_weight=loss_weight))
            want = gan_loss_ref(xb, gt, real, disc, loss_weight=loss_weight)
            if not jnp.allclose(got, want, atol=1e-4, rtol=1e-4):
                ok = False
                print(f"MISMATCH big shape={tuple(xb.shape)} gt={gt} real={real} "
                      f"disc={disc} got={float(got)} want={float(want)}")

    if ok:
        print("KERNEL_OK")
</pallas_src>

<mosaic_0001>
module attributes {stable_mosaic.version = 11 : i64} {
  func.func @kernel(%arg0: i32, %arg1: memref<16x128xf32, #tpu.memory_space<vmem>>, %arg2: memref<16x128xf32, #tpu.memory_space<vmem>>, %arg3: memref<16x128xf32, #tpu.memory_space<vmem>>) attributes {dimension_semantics = [#tpu.dimension_semantics<arbitrary>], iteration_bounds = array<i64: 1>, scalar_prefetch = 0 : i64, scratch_operands = 1 : i64, tpu.core_type = #tpu.core_type<tc>, window_params = [{transform_indices = @transform_0, window_bounds = array<i64: 16, 128>}, {pipeline_mode = #tpu.pipeline_mode<synchronous>, transform_indices = @transform_1, window_bounds = array<i64: 16, 128>}]} {
    %c0_i32 = arith.constant 0 : i32
    %0 = arith.cmpi eq, %arg0, %c0_i32 : i32
    %1 = arith.extui %0 : i1 to i32
    %c0_i32_0 = arith.constant 0 : i32
    %2 = arith.cmpi ne, %1, %c0_i32_0 : i32
    scf.if %2 {
      %cst_11 = arith.constant 0.000000e+00 : f32
      %25 = vector.broadcast %cst_11 : f32 to vector<16x128xf32>
      %c0_12 = arith.constant 0 : index
      %c0_13 = arith.constant 0 : index
      %26 = vector.load %arg3[%c0_12, %c0_13] : memref<16x128xf32, #tpu.memory_space<vmem>>, vector<16x128xf32>
      tpu.vector_store %arg3[%c0_12, %c0_13], %25 {strides = array<i32>} : memref<16x128xf32, #tpu.memory_space<vmem>>, vector<16x128xf32>,
    } else {
    }
    %c0_i32_1 = arith.constant 0 : i32
    %c16_i32 = arith.constant 16 : i32
    %3 = arith.muli %c0_i32_1, %c16_i32 : i32
    %4 = tpu.assume_multiple %3, 16 : i32
    %5 = arith.index_cast %4 : i32 to index
    %c0 = arith.constant 0 : index
    %6 = vector.load %arg1[%5, %c0] : memref<16x128xf32, #tpu.memory_space<vmem>>, vector<16x128xf32>
    %cst = arith.constant 0.000000e+00 : f32
    %7 = vector.broadcast %cst : f32 to vector<16x128xf32>
    %8 = arith.subf %7, %6 : vector<16x128xf32>
    %cst_2 = arith.constant 0.000000e+00 : f32
    %9 = vector.broadcast %cst_2 : f32 to vector<16x128xf32>
    %10 = arith.maximumf %8, %9 : vector<16x128xf32>
    %11 = math.absf %8 : vector<16x128xf32>
    %cst_3 = arith.constant 0.000000e+00 : f32
    %12 = vector.broadcast %cst_3 : f32 to vector<16x128xf32>
    %13 = arith.subf %12, %11 : vector<16x128xf32>
    %14 = math.exp %13 : vector<16x128xf32>
    %15 = math.log1p %14 : vector<16x128xf32>
    %16 = arith.addf %10, %15 : vector<16x128xf32>
    %c0_4 = arith.constant 0 : index
    %c0_5 = arith.constant 0 : index
    %17 = vector.load %arg3[%c0_4, %c0_5] : memref<16x128xf32, #tpu.memory_space<vmem>>, vector<16x128xf32>
    %18 = vector.shape_cast %16 : vector<16x128xf32> to vector<1x16x128xf32>
    %cst_6 = arith.constant dense<0.000000e+00> : vector<16x128xf32>
    %19 = vector.multi_reduction <add>, %18, %cst_6 [0] : vector<1x16x128xf32> to vector<16x128xf32>
    %20 = arith.addf %17, %19 : vector<16x128xf32>
    %c0_7 = arith.constant 0 : index
    %c0_8 = arith.constant 0 : index
    %21 = vector.load %arg3[%c0_7, %c0_8] : memref<16x128xf32, #tpu.memory_space<vmem>>, vector<16x128xf32>
    tpu.vector_store %arg3[%c0_7, %c0_8], %20 {strides = array<i32>} : memref<16x128xf32, #tpu.memory_space<vmem>>, vector<16x128xf32>,
    %c1_i32 = arith.constant 1 : i32
    %c0_i32_9 = arith.constant 0 : i32
    %22 = arith.cmpi eq, %arg0, %c0_i32_9 : i32
    %23 = arith.extui %22 : i1 to i32
    %c0_i32_10 = arith.constant 0 : i32
    %24 = arith.cmpi ne, %23, %c0_i32_10 : i32
    scf.if %24 {
      %c0_11 = arith.constant 0 : index
      %c0_12 = arith.constant 0 : index
      %25 = vector.load %arg3[%c0_11, %c0_12] : memref<16x128xf32, #tpu.memory_space<vmem>>, vector<16x128xf32>
      %c0_13 = arith.constant 0 : index
      %c0_14 = arith.constant 0 : index
      %26 = vector.load %arg2[%c0_13, %c0_14] : memref<16x128xf32, #tpu.memory_space<vmem>>, vector<16x128xf32>
      tpu.vector_store %arg2[%c0_13, %c0_14], %25 {strides = array<i32>} : memref<16x128xf32, #tpu.memory_space<vmem>>, vector<16x128xf32>,
    } else {
    }
    return
  }
  func.func @transform_0(%arg0: i32) -> (i32, i32) {
    %c0_i32 = arith.constant 0 : i32
    %c0_i32_0 = arith.constant 0 : i32
    return %arg0, %c0_i32 : i32, i32
  }
  func.func @transform_1(%arg0: i32) -> (i32, i32) {
    %c0_i32 = arith.constant 0 : i32
    %c0_i32_0 = arith.constant 0 : i32
    %c0_i32_1 = arith.constant 0 : i32
    return %c0_i32, %c0_i32_0 : i32, i32
  }
}

</mosaic_0001>

<llo_original>
// kernel: tpu_custom_call.1
$region0: #{tpu_custom_call.1}
  #allocation0 [shape = 'u32[]', space=smem, size = 0x4, offset = 0x4, fixed_abs, tag = 'smem constant byte address 0x4 - core index']
  #allocation1 [shape = 'u32[144,128]{1,0:T(1,128)}', space=vmem, size = 0x12000, scoped, tag = 'internal scratch']
  #allocation2 [shape = 'f32[16,128]{1,0:T(8,128)}', space=vmem, size = 0x2000, scoped, tag = 'scratch operand']
  %s0 = inlined_call_operand.hbm [shape: f32[16,128], index: 0, kind: input, shape index: {}]
  %s1 = inlined_call_operand.hbm [shape: f32[16,128], index: 1, kind: output, shape index: {}]
  %s2 = sld [smem:[#allocation0]]
  $region26: #{tpu_custom_call.1} parent=0
    _
  %s4 = ssub.s32 1, %s2
  %s5 = scalar_select 0, %s4, %s2
  $region1: #{tpu_custom_call.1} parent=0
    #allocation3 [shape = 'u8[8192]{0}', space=vmem, size = 0x2000, scoped, tag = 'input window, operand 0, single buffered']
    #allocation4 [shape = 's32[1]{0}', space=sflag, size = 0x4, scoped, tag = 'scoped memory for tpu_custom_call.1']
    #allocation5 [shape = 's32[1]{0}', space=sflag, size = 0x4, scoped, tag = 'scoped memory for tpu_custom_call.1']
    #allocation6 [shape = 'u8[8192]{0}', space=vmem, size = 0x2000, scoped, tag = 'output window, operand 0, single buffered']
    %6 = vsyncpa [#allocation4], 0
    %7 = vsyncpa [#allocation5], 0
    // Predicated region
    $region2: #{tpu_custom_call.1} parent=1 // pred_check
      _
    $region3: #{tpu_custom_call.1} parent=1 // pred_check_branch
      %9 = sbr.rel (0) target = $region5
    $region4: #{tpu_custom_call.1} parent=1 // pred_region
      %s11 = ssub.s32 256, 256
      %12 = vsyncadd [#allocation4], %s11
      %s13 = sshll.u32 [#allocation3], 4
      %s14 = int_to_ptr.vmem [resolvable:$true] %s13
      %19 = dma.hbm_to_vmem [thread:$0]  %s0, 256, %s14, [#allocation4], 128, 128, 8
    $region5: #{tpu_custom_call.1} parent=1 // pred_fallthru
      _
    // Predicated region
    $region6: #{tpu_custom_call.1} parent=1 // pred_check
      _
    $region7: #{tpu_custom_call.1} parent=1 // pred_check_branch
      %21 = sbr.rel (0) target = $region9
    $region8: #{tpu_custom_call.1} parent=1 // pred_region
      %22 = dma.done [#allocation4], 256
    $region9: #{tpu_custom_call.1} parent=1 // pred_fallthru
      _
    %p23 = scmp.eq.s32.totalorder 0, 0
    // Predicated region
    $region10: #{tpu_custom_call.1} parent=1 // pred_check
      %p24 = pneg %p23
    $region11: #{tpu_custom_call.1} parent=1 // pred_check_branch
      %26 = sbr.rel (%p24) target = $region13
    $region12: #{tpu_custom_call.1} parent=1 // pred_region
      %27 = vst [vmem:[#allocation2] sm:$0xff] 0.0
      %28 = vst [vmem:[#allocation2 + $0x8] sm:$0xff] 0.0
    $region13: #{tpu_custom_call.1} parent=1 // pred_fallthru
      _
    %v29 = vld [vmem:[#allocation3] sm:$0xff]
    %v30 = vld [vmem:[#allocation3 + $0x8] sm:$0xff]
    %v31 = vsub.f32 0.0, %v29
    %v32 = vsub.f32 0.0, %v30
    %v33 = vmax.f32 %v31, 0.0
    %v34 = vmax.f32 %v32, 0.0
    %v35 = vand.u32 2147483647, %v31
    %v36 = vand.u32 2147483647, %v32
    %v37 = vsub.f32 0.0, %v35
    %v38 = vsub.f32 0.0, %v36
    %v39 = vmul.f32 %v37, 1.442695
    %v40 = vpow.pop %v39
    %v41 = vmul.f32 %v38, 1.442695
    %v42 = vpow.pop %v41
    %v43 = vadd.f32 %v40, 1.0
    %v44 = vlog2.pop %v43
    %v45 = vmul.f32 %v44, 0.6931472
    %v46 = vmul.f32 -0.5, %v40
    %v47 = vadd.f32 %v46, 1.0
    %v48 = vmul.f32 %v47, %v40
    %v49 = vand.u32 2147483647, %v40
    %vm50 = vcmp.lt.f32.partialorder %v49, 0.0004427343
    %v51 = vsel %vm50, %v48, %v45
    %v52 = vadd.f32 %v42, 1.0
    %v53 = vlog2.pop %v52
    %v54 = vmul.f32 %v53, 0.6931472
    %v55 = vmul.f32 -0.5, %v42
    %v56 = vadd.f32 %v55, 1.0
    %v57 = vmul.f32 %v56, %v42
    %v58 = vand.u32 2147483647, %v42
    %vm59 = vcmp.lt.f32.partialorder %v58, 0.0004427343
    %v60 = vsel %vm59, %v57, %v54
    %v61 = vadd.f32 %v33, %v51
    %v62 = vadd.f32 %v34, %v60
    %v63 = vld [vmem:[#allocation2] sm:$0xff]
    %v64 = vld [vmem:[#allocation2 + $0x8] sm:$0xff]
    %v65 = vadd.f32 %v61, 0.0
    %v66 = vadd.f32 %v62, 0.0
    %v67 = vadd.f32 %v63, %v65
    %v68 = vadd.f32 %v64, %v66
    %69 = vst [vmem:[#allocation2] sm:$0xff] %v67
    %70 = vst [vmem:[#allocation2 + $0x8] sm:$0xff] %v68
    // Predicated region
    $region14: #{tpu_custom_call.1} parent=1 // pred_check
      %p71 = pneg %p23
    $region15: #{tpu_custom_call.1} parent=1 // pred_check_branch
      %73 = sbr.rel (%p71) target = $region17
    $region16: #{tpu_custom_call.1} parent=1 // pred_region
      %v74 = vld [vmem:[#allocation2] sm:$0xff]
      %v75 = vld [vmem:[#allocation2 + $0x8] sm:$0xff]
      %76 = vst [vmem:[#allocation6] sm:$0xff] %v74
      %77 = vst [vmem:[#allocation6 + $0x8] sm:$0xff] %v75
    $region17: #{tpu_custom_call.1} parent=1 // pred_fallthru
      _
    // Predicated region
    $region18: #{tpu_custom_call.1} parent=1 // pred_check
      _
    $region19: #{tpu_custom_call.1} parent=1 // pred_check_branch
      %79 = sbr.rel (0) target = $region21
    $region20: #{tpu_custom_call.1} parent=1 // pred_region
      %s81 = ssub.s32 256, 256
      %82 = vsyncadd [#allocation5], %s81
      %s83 = sshll.u32 [#allocation6], 4
      %s84 = int_to_ptr.vmem [resolvable:$true] %s83
      %89 = dma.vmem_to_hbm [thread:$0]  %s84, 256, %s1, [#allocation5], 128, 128, 8
    $region21: #{tpu_custom_call.1} parent=1 // pred_fallthru
      _
    // Predicated region
    $region22: #{tpu_custom_call.1} parent=1 // pred_check
      _
    $region23: #{tpu_custom_call.1} parent=1 // pred_check_branch
      %91 = sbr.rel (0) target = $region25
    $region24: #{tpu_custom_call.1} parent=1 // pred_region
      %92 = dma.done [#allocation5], 256
    $region25: #{tpu_custom_call.1} parent=1 // pred_fallthru
      _
    %93 = vsyncpa [#allocation4], 1
    %94 = vsyncpa [#allocation5], 1

</llo_original>
